<compile_context>
chip_gen: v7x
topology: tpu7x:2x2x1
jax: 0.10.0
libtpu: 0.0.40
codegen_flags: <defaults>
</compile_context>

<pallas_src>
import functools

import jax
import jax.numpy as jnp
from jax import lax
from jax.experimental import pallas as pl
from jax.experimental.pallas import tpu as pltpu


_BLUR_TAPS = ((1.0 / 16, 2.0 / 16, 1.0 / 16),
              (2.0 / 16, 4.0 / 16, 2.0 / 16),
              (1.0 / 16, 2.0 / 16, 1.0 / 16))


# ------------------------------ Pallas kernel --------------------------------

def _blurpool_conv_kernel(*refs, th, wo, cin, has_bias):
    """Fused blur(3x3, stride1, pad1) + conv(3x3, stride2, pad1) row tile.

    refs:
      x_ref : (1, Hp, Wo+2, 2*cin) bf16  padded input, space-to-depth along W,
                                         resident per batch (constant index map)
      w_ref : (9*cin, Cout)        bf16  conv weights, (kh, kw, cin) ordering
      b_ref : (1, Cout)            f32   only when has_bias
      o_ref : (1, th, wo, Cout)    f32
    """
    if has_bias:
        x_ref, w_ref, b_ref, o_ref = refs
    else:
        x_ref, w_ref, o_ref = refs
        b_ref = None

    rb2 = 2 * th + 2                      # blurred rows computed (even for /2 fold)
    r2 = rb2 + 2                          # raw padded rows consumed

    t = pl.program_id(1)
    r0 = pl.multiple_of(t * (2 * th), 2 * th)   # first padded raw row of this tile

    # (r2, wo+2, 2*cin): raw rows, channels = [even cols | odd cols].
    x = x_ref[0, pl.ds(r0, r2), :, :].astype(jnp.float32)

    # --- separable blur, un-normalized (1,2,1) taps, single /16 at the end ---
    t1 = x[0:rb2] + 2.0 * x[1:rb2 + 1] + x[2:rb2 + 2]          # row pass

    # Conv zero-padding of the *blurred* tensor (rows): blurred row -1 must be
    # exactly 0.  Only the first row tile (top of image) touches it.
    top_keep = (r0 > 0).astype(jnp.float32)
    t1 = jnp.concatenate([t1[0:1] * top_keep, t1[1:]], axis=0)

    t1e = t1[:, :, :cin]                  # even raw columns
    t1o = t1[:, :, cin:]                  # odd raw columns

    # Column pass in the folded layout:
    #   beven[:, kc] = blurred col (2*kc - 1),  kc in [0, wo]
    #   bodd [:, kc] = blurred col (2*kc)    ,  kc in [0, wo)
    scale = jnp.float32(1.0 / 16.0)
    beven = (t1e[:, 0:wo + 1] + 2.0 * t1o[:, 0:wo + 1] + t1e[:, 1:wo + 2]) * scale
    bodd = (t1o[:, 0:wo] + 2.0 * t1e[:, 1:wo + 1] + t1o[:, 1:wo + 1]) * scale

    # Conv zero-padding (cols): blurred col -1 (kc == 0 of beven) must be 0.
    beven = jnp.concatenate(
        [jnp.zeros_like(beven[:, 0:1]), beven[:, 1:]], axis=1)

    beven = beven.astype(jnp.bfloat16)
    bodd = bodd.astype(jnp.bfloat16)

    # Stride-2 row selection for the conv row taps: free leading-dim reshape.
    bev2 = beven.reshape(th + 1, 2, wo + 1, cin)
    bod2 = bodd.reshape(th + 1, 2, wo, cin)

    # im2col patches; K ordered (kh tap v, kw tap u2, cin) to match HWIO weights.
    pieces = []
    for v in range(3):
        if v == 0:
            ev, od = bev2[0:th, 0], bod2[0:th, 0]       # blurred rows 2*oh
        elif v == 1:
            ev, od = bev2[0:th, 1], bod2[0:th, 1]       # blurred rows 2*oh + 1
        else:
            ev, od = bev2[1:th + 1, 0], bod2[1:th + 1, 0]  # blurred rows 2*oh + 2
        pieces += [ev[:, 0:wo], od, ev[:, 1:wo + 1]]       # kw taps 0, 1, 2
    a = jnp.concatenate(pieces, axis=-1).reshape(th * wo, 9 * cin)   # (M, K)

    acc = jnp.dot(a, w_ref[...], preferred_element_type=jnp.float32)  # (M, Cout)
    if has_bias:
        acc = acc + b_ref[...]
    o_ref[0] = acc.reshape(th, wo, o_ref.shape[-1]).astype(o_ref.dtype)


# -------------------------------- wrapper ------------------------------------

def _pick_row_tile(ho, wo, cap=512):
    """Largest divisor of Ho with M = th*Wo <= cap (MXU row packing)."""
    best = 1
    for th in range(1, ho + 1):
        if ho % th == 0 and th * wo <= cap:
            best = th
    return best


@functools.partial(jax.jit, static_argnames=("stride", "padding"))
def blurpool_conv2d_forward(x_nchw, conv_w_hwio, conv_b=None, *,
                            stride=2, padding=1):
    """BlurPoolConv2d.forward: conv(blur(x)). NCHW in, NCHW out (like PyTorch)."""
    N, C, H, W = x_nchw.shape
    kh, kw, wcin, Cout = conv_w_hwio.shape
    if (kh, kw) != (3, 3) or wcin != C or stride != 2 or padding != 1 \
            or H % 2 or W % 2:
        raise NotImplementedError(
            "fused BlurPoolConv2d kernel is specialized to 3x3 / stride 2 / "
            "padding 1 / groups 1 convs with even H, W")
    Ho, Wo = H // 2, W // 2
    P = padding + 1                       # blur pad (1) + conv pad (1)
    Hp, Wp = H + 2 * P, W + 2 * P

    # NCHW f32 -> NHWC bf16, one pad, space-to-depth along W (free reshape).
    # TODO(synk): an NHWC module boundary would drop the two transposes (one
    #             extra HBM pass each around the kernel).
    x = jnp.transpose(x_nchw, (0, 2, 3, 1)).astype(jnp.bfloat16)
    xs = jnp.pad(x, ((0, 0), (P, P), (P, P), (0, 0)))
    xs = xs.reshape(N, Hp, Wp // 2, 2 * C)

    w2 = conv_w_hwio.astype(jnp.bfloat16).reshape(kh * kw * C, Cout)

    th = _pick_row_tile(Ho, Wo)
    grid = (N, Ho // th)
    has_bias = conv_b is not None

    in_specs = [
        # Whole padded image, resident per batch (index map constant in t).
        pl.BlockSpec((1, Hp, Wp // 2, 2 * C), lambda n, t: (n, 0, 0, 0)),
        # Weights fully resident (fetched once).
        pl.BlockSpec((kh * kw * C, Cout), lambda n, t: (0, 0)),
    ]
    operands = [xs, w2]
    if has_bias:
        in_specs.append(pl.BlockSpec((1, Cout), lambda n, t: (0, 0)))
        operands.append(conv_b.astype(jnp.float32).reshape(1, Cout))

    y = pl.pallas_call(
        functools.partial(_blurpool_conv_kernel, th=th, wo=Wo, cin=C,
                          has_bias=has_bias),
        grid=grid,
        in_specs=in_specs,
        out_specs=pl.BlockSpec((1, th, Wo, Cout), lambda n, t: (n, t, 0, 0)),
        out_shape=jax.ShapeDtypeStruct((N, Ho, Wo, Cout), jnp.float32),
        compiler_params=pltpu.CompilerParams(
            dimension_semantics=("parallel", "parallel"),
            vmem_limit_bytes=48 * 1024 * 1024),
    )(*operands)
    return jnp.transpose(y, (0, 3, 1, 2))             # NHWC -> NCHW


# ------------------------------- reference -----------------------------------

def _reference(x_nchw, conv_w_hwio, stride, padding):
    """Pure-XLA reference on the same bf16-cast tensors (f32 accumulation)."""
    x = jnp.transpose(x_nchw, (0, 2, 3, 1)).astype(jnp.bfloat16)
    C = x.shape[-1]
    filt = jnp.array(_BLUR_TAPS, jnp.float32).reshape(3, 3, 1, 1)
    filt = jnp.tile(filt, (1, 1, 1, C)).astype(jnp.bfloat16)
    blurred = lax.conv_general_dilated(
        x, filt, window_strides=(1, 1), padding=((1, 1), (1, 1)),
        dimension_numbers=("NHWC", "HWIO", "NHWC"),
        feature_group_count=C, preferred_element_type=jnp.float32)
    blurred = blurred.astype(jnp.bfloat16)
    y = lax.conv_general_dilated(
        blurred, conv_w_hwio.astype(jnp.bfloat16),
        window_strides=(stride, stride),
        padding=((padding, padding), (padding, padding)),
        dimension_numbers=("NHWC", "HWIO", "NHWC"),
        preferred_element_type=jnp.float32)
    return jnp.transpose(y, (0, 3, 1, 2))


if __name__ == "__main__":
    key = jax.random.PRNGKey(0)
    kx, kw_ = jax.random.split(key)

    # Small PyTorch-style NCHW input. in_channels=16 (BlurPool is only applied
    # to convs with >=16 input channels in the source repo).
    N, C, H, W = 2, 16, 16, 16
    Cout, K, stride, padding = 128, 3, 2, 1

    x = jax.random.normal(kx, (N, C, H, W), jnp.float32)
    # Wrapped conv: Conv2d(C, Cout, 3, stride=2, padding=1, bias=False), HWIO.
    w = jax.random.normal(kw_, (K, K, C, Cout), jnp.float32) * \
        (2.0 / (K * K * C)) ** 0.5

    out = blurpool_conv2d_forward(x, w, None, stride=stride, padding=padding)
    out = jax.block_until_ready(out)

    assert out.shape == (N, Cout, H // stride, W // stride), out.shape
    assert bool(jnp.all(jnp.isfinite(out)))

    ref = _reference(x, w, stride, padding)
    err = float(jnp.max(jnp.abs(out - ref)))
    assert err < 5e-2, f"mismatch vs reference: max abs err {err}"

    print("KERNEL_OK")
</pallas_src>

<mosaic_0001>
module attributes {stable_mosaic.version = 11 : i64} {
  func.func @_blurpool_conv_kernel(%arg0: i32, %arg1: i32, %arg2: memref<1x20x10x32xbf16, #tpu.memory_space<vmem>>, %arg3: memref<144x128xbf16, #tpu.memory_space<vmem>>, %arg4: memref<1x8x8x128xf32, #tpu.memory_space<vmem>>) attributes {dimension_semantics = [#tpu.dimension_semantics<parallel>, #tpu.dimension_semantics<parallel>], iteration_bounds = array<i64: 2, 1>, scalar_prefetch = 0 : i64, scratch_operands = 0 : i64, tpu.core_type = #tpu.core_type<tc>, window_params = [{transform_indices = @transform_0, window_bounds = array<i64: 1, 20, 10, 32>}, {pipeline_mode = #tpu.pipeline_mode<synchronous>, transform_indices = @transform_1, window_bounds = array<i64: 144, 128>}, {transform_indices = @transform_2, window_bounds = array<i64: 1, 8, 8, 128>}]} {
    %c16_i32 = arith.constant 16 : i32
    %0 = arith.muli %arg1, %c16_i32 : i32
    %1 = tpu.assume_multiple %0, 16 : i32
    %c0 = arith.constant 0 : index
    %2 = arith.index_cast %1 : i32 to index
    %c0_0 = arith.constant 0 : index
    %c0_1 = arith.constant 0 : index
    %3 = vector.load %arg2[%c0, %2, %c0_0, %c0_1] : memref<1x20x10x32xbf16, #tpu.memory_space<vmem>>, vector<1x20x10x32xbf16>
    %4 = vector.shape_cast %3 : vector<1x20x10x32xbf16> to vector<20x10x32xbf16>
    %5 = arith.extf %4 : vector<20x10x32xbf16> to vector<20x10x32xf32>
    %6 = vector.extract_strided_slice %5 {offsets = [0, 0, 0], sizes = [18, 10, 32], strides = [1, 1, 1]} : vector<20x10x32xf32> to vector<18x10x32xf32>
    %7 = vector.extract_strided_slice %5 {offsets = [1, 0, 0], sizes = [18, 10, 32], strides = [1, 1, 1]} : vector<20x10x32xf32> to vector<18x10x32xf32>
    %cst = arith.constant 2.000000e+00 : f32
    %8 = vector.broadcast %cst : f32 to vector<18x10x32xf32>
    %9 = arith.mulf %8, %7 : vector<18x10x32xf32>
    %10 = arith.addf %6, %9 : vector<18x10x32xf32>
    %11 = vector.extract_strided_slice %5 {offsets = [2, 0, 0], sizes = [18, 10, 32], strides = [1, 1, 1]} : vector<20x10x32xf32> to vector<18x10x32xf32>
    %12 = arith.addf %10, %11 : vector<18x10x32xf32>
    %c0_i32 = arith.constant 0 : i32
    %13 = arith.cmpi sgt, %1, %c0_i32 : i32
    %14 = arith.extui %13 : i1 to i32
    %15 = arith.sitofp %14 : i32 to f32
    %16 = vector.extract_strided_slice %12 {offsets = [0, 0, 0], sizes = [1, 10, 32], strides = [1, 1, 1]} : vector<18x10x32xf32> to vector<1x10x32xf32>
    %17 = vector.broadcast %15 : f32 to vector<1x10x32xf32>
    %18 = arith.mulf %16, %17 : vector<1x10x32xf32>
    %19 = vector.extract_strided_slice %12 {offsets = [1, 0, 0], sizes = [17, 10, 32], strides = [1, 1, 1]} : vector<18x10x32xf32> to vector<17x10x32xf32>
    %20 = tpu.concatenate %18, %19 in 0 : vector<1x10x32xf32>, vector<17x10x32xf32> -> vector<18x10x32xf32>
    %21 = vector.extract_strided_slice %20 {offsets = [0, 0, 0], sizes = [18, 10, 16], strides = [1, 1, 1]} : vector<18x10x32xf32> to vector<18x10x16xf32>
    %22 = vector.extract_strided_slice %20 {offsets = [0, 0, 16], sizes = [18, 10, 16], strides = [1, 1, 1]} : vector<18x10x32xf32> to vector<18x10x16xf32>
    %23 = vector.extract_strided_slice %21 {offsets = [0, 0, 0], sizes = [18, 9, 16], strides = [1, 1, 1]} : vector<18x10x16xf32> to vector<18x9x16xf32>
    %24 = vector.extract_strided_slice %22 {offsets = [0, 0, 0], sizes = [18, 9, 16], strides = [1, 1, 1]} : vector<18x10x16xf32> to vector<18x9x16xf32>
    %cst_2 = arith.constant 2.000000e+00 : f32
    %25 = vector.broadcast %cst_2 : f32 to vector<18x9x16xf32>
    %26 = arith.mulf %25, %24 : vector<18x9x16xf32>
    %27 = arith.addf %23, %26 : vector<18x9x16xf32>
    %28 = vector.extract_strided_slice %21 {offsets = [0, 1, 0], sizes = [18, 9, 16], strides = [1, 1, 1]} : vector<18x10x16xf32> to vector<18x9x16xf32>
    %29 = arith.addf %27, %28 : vector<18x9x16xf32>
    %cst_3 = arith.constant 6.250000e-02 : f32
    %30 = vector.broadcast %cst_3 : f32 to vector<18x9x16xf32>
    %31 = arith.mulf %29, %30 : vector<18x9x16xf32>
    %32 = vector.extract_strided_slice %22 {offsets = [0, 0, 0], sizes = [18, 8, 16], strides = [1, 1, 1]} : vector<18x10x16xf32> to vector<18x8x16xf32>
    %33 = vector.extract_strided_slice %21 {offsets = [0, 1, 0], sizes = [18, 8, 16], strides = [1, 1, 1]} : vector<18x10x16xf32> to vector<18x8x16xf32>
    %cst_4 = arith.constant 2.000000e+00 : f32
    %34 = vector.broadcast %cst_4 : f32 to vector<18x8x16xf32>
    %35 = arith.mulf %34, %33 : vector<18x8x16xf32>
    %36 = arith.addf %32, %35 : vector<18x8x16xf32>
    %37 = vector.extract_strided_slice %22 {offsets = [0, 1, 0], sizes = [18, 8, 16], strides = [1, 1, 1]} : vector<18x10x16xf32> to vector<18x8x16xf32>
    %38 = arith.addf %36, %37 : vector<18x8x16xf32>
    %cst_5 = arith.constant 6.250000e-02 : f32
    %39 = vector.broadcast %cst_5 : f32 to vector<18x8x16xf32>
    %40 = arith.mulf %38, %39 : vector<18x8x16xf32>
    %cst_6 = arith.constant 0.000000e+00 : f32
    %41 = vector.broadcast %cst_6 : f32 to vector<18x1x16xf32>
    %42 = vector.extract_strided_slice %31 {offsets = [0, 1, 0], sizes = [18, 8, 16], strides = [1, 1, 1]} : vector<18x9x16xf32> to vector<18x8x16xf32>
    %43 = tpu.concatenate %41, %42 in 1 : vector<18x1x16xf32>, vector<18x8x16xf32> -> vector<18x9x16xf32>
    %44 = arith.truncf %43 : vector<18x9x16xf32> to vector<18x9x16xbf16>
    %45 = arith.truncf %40 : vector<18x8x16xf32> to vector<18x8x16xbf16>
    %46 = vector.shape_cast %44 : vector<18x9x16xbf16> to vector<9x2x9x16xbf16>
    %47 = vector.shape_cast %45 : vector<18x8x16xbf16> to vector<9x2x8x16xbf16>
    %48 = vector.extract_strided_slice %46 {offsets = [0, 0, 0, 0], sizes = [8, 1, 9, 16], strides = [1, 1, 1, 1]} : vector<9x2x9x16xbf16> to vector<8x1x9x16xbf16>
    %49 = vector.shape_cast %48 : vector<8x1x9x16xbf16> to vector<8x9x16xbf16>
    %50 = vector.extract_strided_slice %47 {offsets = [0, 0, 0, 0], sizes = [8, 1, 8, 16], strides = [1, 1, 1, 1]} : vector<9x2x8x16xbf16> to vector<8x1x8x16xbf16>
    %51 = vector.shape_cast %50 : vector<8x1x8x16xbf16> to vector<8x8x16xbf16>
    %52 = vector.extract_strided_slice %49 {offsets = [0, 0, 0], sizes = [8, 8, 16], strides = [1, 1, 1]} : vector<8x9x16xbf16> to vector<8x8x16xbf16>
    %53 = vector.extract_strided_slice %49 {offsets = [0, 1, 0], sizes = [8, 8, 16], strides = [1, 1, 1]} : vector<8x9x16xbf16> to vector<8x8x16xbf16>
    %54 = vector.extract_strided_slice %46 {offsets = [0, 1, 0, 0], sizes = [8, 1, 9, 16], strides = [1, 1, 1, 1]} : vector<9x2x9x16xbf16> to vector<8x1x9x16xbf16>
    %55 = vector.shape_cast %54 : vector<8x1x9x16xbf16> to vector<8x9x16xbf16>
    %56 = vector.extract_strided_slice %47 {offsets = [0, 1, 0, 0], sizes = [8, 1, 8, 16], strides = [1, 1, 1, 1]} : vector<9x2x8x16xbf16> to vector<8x1x8x16xbf16>
    %57 = vector.shape_cast %56 : vector<8x1x8x16xbf16> to vector<8x8x16xbf16>
    %58 = vector.extract_strided_slice %55 {offsets = [0, 0, 0], sizes = [8, 8, 16], strides = [1, 1, 1]} : vector<8x9x16xbf16> to vector<8x8x16xbf16>
    %59 = vector.extract_strided_slice %55 {offsets = [0, 1, 0], sizes = [8, 8, 16], strides = [1, 1, 1]} : vector<8x9x16xbf16> to vector<8x8x16xbf16>
    %60 = vector.extract_strided_slice %46 {offsets = [1, 0, 0, 0], sizes = [8, 1, 9, 16], strides = [1, 1, 1, 1]} : vector<9x2x9x16xbf16> to vector<8x1x9x16xbf16>
    %61 = vector.shape_cast %60 : vector<8x1x9x16xbf16> to vector<8x9x16xbf16>
    %62 = vector.extract_strided_slice %47 {offsets = [1, 0, 0, 0], sizes = [8, 1, 8, 16], strides = [1, 1, 1, 1]} : vector<9x2x8x16xbf16> to vector<8x1x8x16xbf16>
    %63 = vector.shape_cast %62 : vector<8x1x8x16xbf16> to vector<8x8x16xbf16>
    %64 = vector.extract_strided_slice %61 {offsets = [0, 0, 0], sizes = [8, 8, 16], strides = [1, 1, 1]} : vector<8x9x16xbf16> to vector<8x8x16xbf16>
    %65 = vector.extract_strided_slice %61 {offsets = [0, 1, 0], sizes = [8, 8, 16], strides = [1, 1, 1]} : vector<8x9x16xbf16> to vector<8x8x16xbf16>
    %66 = tpu.concatenate %52, %51, %53, %58, %57, %59, %64, %63, %65 in 2 : vector<8x8x16xbf16>, vector<8x8x16xbf16>, vector<8x8x16xbf16>, vector<8x8x16xbf16>, vector<8x8x16xbf16>, vector<8x8x16xbf16>, vector<8x8x16xbf16>, vector<8x8x16xbf16>, vector<8x8x16xbf16> -> vector<8x8x144xbf16>
    %67 = vector.shape_cast %66 : vector<8x8x144xbf16> to vector<64x144xbf16>
    %c0_7 = arith.constant 0 : index
    %c0_8 = arith.constant 0 : index
    %68 = vector.load %arg3[%c0_7, %c0_8] : memref<144x128xbf16, #tpu.memory_space<vmem>>, vector<144x128xbf16>
    %cst_9 = arith.constant dense<0.000000e+00> : vector<64x128xf32>
    %69 = tpu.matmul %67, %68, %cst_9 {dimension_numbers = #tpu.dot_dimension_numbers<[1], [0], [0], [1], [0, 0, 1, 1], [], []>} : vector<64x144xbf16>, vector<144x128xbf16>, vector<64x128xf32> -> vector<64x128xf32>
    %70 = vector.shape_cast %69 : vector<64x128xf32> to vector<8x8x128xf32>
    %c0_10 = arith.constant 0 : index
    %c0_11 = arith.constant 0 : index
    %c0_12 = arith.constant 0 : index
    %c0_13 = arith.constant 0 : index
    %71 = vector.load %arg4[%c0_10, %c0_11, %c0_12, %c0_13] : memref<1x8x8x128xf32, #tpu.memory_space<vmem>>, vector<1x8x8x128xf32>
    %72 = vector.shape_cast %71 : vector<1x8x8x128xf32> to vector<8x8x128xf32>
    %73 = vector.shape_cast %70 : vector<8x8x128xf32> to vector<1x8x8x128xf32>
    tpu.vector_store %arg4[%c0_10, %c0_11, %c0_12, %c0_13], %73 {strides = array<i32>} : memref<1x8x8x128xf32, #tpu.memory_space<vmem>>, vector<1x8x8x128xf32>,
    return
  }
  func.func @transform_0(%arg0: i32, %arg1: i32) -> (i32, i32, i32, i32) {
    %c0_i32 = arith.constant 0 : i32
    %c0_i32_0 = arith.constant 0 : i32
    %c0_i32_1 = arith.constant 0 : i32
    %c0_i32_2 = arith.constant 0 : i32
    return %arg0, %c0_i32, %c0_i32_0, %c0_i32_1 : i32, i32, i32, i32
  }
  func.func @transform_1(%arg0: i32, %arg1: i32) -> (i32, i32) {
    %c0_i32 = arith.constant 0 : i32
    %c0_i32_0 = arith.constant 0 : i32
    %c0_i32_1 = arith.constant 0 : i32
    return %c0_i32, %c0_i32_0 : i32, i32
  }
  func.func @transform_2(%arg0: i32, %arg1: i32) -> (i32, i32, i32, i32) {
    %c0_i32 = arith.constant 0 : i32
    %c0_i32_0 = arith.constant 0 : i32
    %c0_i32_1 = arith.constant 0 : i32
    return %arg0, %arg1, %c0_i32, %c0_i32_0 : i32, i32, i32, i32
  }
}

</mosaic_0001>

<llo_original>
// kernel: blurpool_conv2d_forward.1
$region0: #{blurpool_conv2d_forward.1}
  #allocation0 [shape = 'u32[]', space=smem, size = 0x4, offset = 0x4, fixed_abs, tag = 'smem constant byte address 0x4 - core index']
  #allocation1 [shape = 'u32[144,128]{1,0:T(1,128)}', space=vmem, size = 0x12000, scoped, tag = 'internal scratch']
  %s0 = inlined_call_operand.vmem [shape: bf16[2,20,10,32], index: 0, kind: input, shape index: {}]
  %s1 = inlined_call_operand.vmem [shape: bf16[144,128], index: 1, kind: input, shape index: {}]
  %s2 = inlined_call_operand.hbm [shape: f32[2,8,8,128], index: 2, kind: output, shape index: {}]
  %s3 = sld [smem:[#allocation0]]
  $region41: #{blurpool_conv2d_forward.1} parent=0
    _
  %s5 = ssub.s32 1, %s3
  %s6 = scalar_select 0, %s5, %s3
  $region1: #{blurpool_conv2d_forward.1} parent=0
    #allocation2 [shape = 'u8[65536]{0}', space=vmem, size = 0x10000, scoped, tag = 'output window, operand 0']
    #allocation3 [shape = 's32[2]{0}', space=sflag, size = 0x8, scoped, tag = 'scoped memory for blurpool_conv2d_forward.1']
    %7 = vsyncpa [#allocation3], 0
    %s8 = scalar_lea.sflag [#allocation3], 1
    %9 = vsyncpa %s8, 0
    loop: start=0, step=1, limit=4
    $region2: #{blurpool_conv2d_forward.1} parent=1 // loop_pre_header
      _
    $region3: #{blurpool_conv2d_forward.1} parent=1 // loop_header
      %s11 = sphi 0, %s15
      %p12 = scmp.ge.s32.totalorder %s11, 4
      %s18 = sphi 0, %s30
      %s19 = sphi 0, %s26
      %s20 = sphi 0, %s18
      %s21 = sphi 0, %s19
      %s22 = sphi 0, %s20
      %s23 = sphi 0, %s21
      %s33 = sphi 0, %s35
      %s36 = sphi 0, %s33
      %s37 = sphi 0, %s36
      %s53 = sphi 0, %s37
      %s57 = sphi 0, %s57
      %s59 = sphi 0, %s57
      %s60 = sphi 0, %s59
      %s74 = sphi 0, %s60
      %s82 = sphi 0, %s84
      %s85 = sphi 0, %s82
      %s86 = sphi 0, %s85
      %s102 = sphi 0, %s86
    $region4: #{blurpool_conv2d_forward.1} parent=1 // loop_header_branch
      %14 = sbr.rel (%p12) target = $region8
    $region5: #{blurpool_conv2d_forward.1} parent=1 // loop_body
      %s16 = ssub.s32 %s11, 1
      %s17 = ssub.s32 %s11, 2
      %s24 = sadd.s32 1, %s19
      %p25 = scmp.ge.s32.totalorder %s24, 1
      %s26 = scalar_select %p25, 0, %s24
      %s27 = sadd.s32 1, %s18
      %s28 = scalar_select %p25, %s27, %s18
      %p29 = scmp.ge.s32.totalorder %s28, 2
      %s30 = scalar_select %p29, 0, %s28
      %s31 = ssub.s32 %s18, %s30
      %p32 = scmp.eq.s32.totalorder %s31, 0
      %s34 = sadd.s32 %s33, 1
      %s35 = scalar_select %p32, %s33, %s34
      %p38 = pneg %p32
      %p39 = scmp.eq.s32.totalorder %s11, 1
      %p40 = por %p38, %p39
      %p41 = scmp.ne.s32.totalorder %s33, %s36
      %p42 = scmp.eq.s32.totalorder %s11, 0
      %p43 = por %p41, %p42
      %p44 = scmp.ne.s32.totalorder %s33, %s36
      %p45 = scmp.eq.s32.totalorder %s16, 1
      %p46 = por %p44, %p45
      %p47 = scmp.ne.s32.totalorder %s36, %s37
      %p48 = scmp.eq.s32.totalorder %s16, 0
      %p49 = por %p47, %p48
      %p50 = scmp.ne.s32.totalorder %s36, %s37
      %p51 = scmp.eq.s32.totalorder %s17, 1
      %p52 = por %p50, %p51
      %p54 = scmp.ne.s32.totalorder %s37, %s53
      %p55 = scmp.eq.s32.totalorder %s17, 0
      %p56 = por %p54, %p55
      %s58 = sadd.s32 %s57, 1
      %p61 = scmp.eq.s32.totalorder %s11, 1
      %p62 = scmp.ne.s32.totalorder %s57, %s59
      %p63 = scmp.eq.s32.totalorder %s11, 0
      %p64 = por %p62, %p63
      %p65 = scmp.ne.s32.totalorder %s57, %s59
      %p66 = scmp.eq.s32.totalorder %s16, 1
      %p67 = por %p65, %p66
      %p68 = scmp.ne.s32.totalorder %s59, %s60
      %p69 = scmp.eq.s32.totalorder %s16, 0
      %p70 = por %p68, %p69
      %p71 = scmp.ne.s32.totalorder %s59, %s60
      %p72 = scmp.eq.s32.totalorder %s17, 1
      %p73 = por %p71, %p72
      %p75 = scmp.ne.s32.totalorder %s60, %s74
      %p76 = scmp.eq.s32.totalorder %s17, 0
      %p77 = por %p75, %p76
      %s78 = ssub.s32 %s18, %s30
      %s79 = ssub.s32 %s19, %s26
      %s80 = sor.u32 %s78, %s79
      %p81 = scmp.eq.s32.totalorder %s80, 0
      %s83 = sadd.s32 %s82, 1
      %s84 = scalar_select %p81, %s82, %s83
      %p87 = pneg %p81
      %p88 = scmp.eq.s32.totalorder %s11, 1
      %p89 = por %p87, %p88
      %p90 = scmp.ne.s32.totalorder %s82, %s85
      %p91 = scmp.eq.s32.totalorder %s11, 0
      %p92 = por %p90, %p91
      %p93 = scmp.ne.s32.totalorder %s82, %s85
      %p94 = scmp.eq.s32.totalorder %s16, 1
      %p95 = por %p93, %p94
      %p96 = scmp.ne.s32.totalorder %s85, %s86
      %p97 = scmp.eq.s32.totalorder %s16, 0
      %p98 = por %p96, %p97
      %p99 = scmp.ne.s32.totalorder %s85, %s86
      %p100 = scmp.eq.s32.totalorder %s17, 1
      %p101 = por %p99, %p100
      %p103 = scmp.ne.s32.totalorder %s86, %s102
      %p104 = scmp.eq.s32.totalorder %s17, 0
      %p105 = por %p103, %p104
      %p106 = scmp.le.s32.totalorder 1, %s11
      %p107 = scmp.lt.s32.totalorder %s11, 3
      %p108 = pnand %p106, %p107
      %p109 = pneg %p108
      // Predicated region
      $region9: #{blurpool_conv2d_forward.1} parent=5 // pred_check
        _
      $region10: #{blurpool_conv2d_forward.1} parent=5 // pred_check_branch
        %111 = sbr.rel (%p108) target = $region12
      $region11: #{blurpool_conv2d_forward.1} parent=5 // pred_region
        %s112 = ssub.s32 %s11, 1
        // Predicated region
        $region13: #{blurpool_conv2d_forward.1} parent=11 // pred_check
          %p113 = pneg %p70
        $region14: #{blurpool_conv2d_forward.1} parent=11 // pred_check_branch
          %115 = sbr.rel (%p113) target = $region16
        $region15: #{blurpool_conv2d_forward.1} parent=11 // pred_region
          _
        $region16: #{blurpool_conv2d_forward.1} parent=11 // pred_fallthru
          _
      $region12: #{blurpool_conv2d_forward.1} parent=5 // pred_fallthru
        _
      %p116 = scmp.lt.s32.totalorder %s11, 2
      // Predicated region
      $region17: #{blurpool_conv2d_forward.1} parent=5 // pred_check
        %p117 = pneg %p116
      $region18: #{blurpool_conv2d_forward.1} parent=5 // pred_check_branch
        %119 = sbr.rel (%p117) target = $region20
      $region19: #{blurpool_conv2d_forward.1} parent=5 // pred_region
        // Predicated region
        $region21: #{blurpool_conv2d_forward.1} parent=19 // pred_check
          %p120 = pneg %p43
        $region22: #{blurpool_conv2d_forward.1} parent=19 // pred_check_branch
          %122 = sbr.rel (%p120) target = $region24
        $region23: #{blurpool_conv2d_forward.1} parent=19 // pred_region
          %p123 = scmp.lt.s32.totalorder %s18, 1
          %s124 = scalar_select %p123, %s18, 1
          %s125 = smul.addr %s124, 40
          %s126 = smul.addr %s125, 4
          %s127 = scalar_lea.vmem %s0, %s126
        $region24: #{blurpool_conv2d_forward.1} parent=19 // pred_fallthru
          _
      $region20: #{blurpool_conv2d_forward.1} parent=5 // pred_fallthru
        _
      %p128 = scmp.le.s32.totalorder 1, %s11
      %p129 = scmp.lt.s32.totalorder %s11, 3
      %p130 = pnand %p128, %p129
      %p131 = pneg %p130
      // Predicated region
      $region25: #{blurpool_conv2d_forward.1} parent=5 // pred_check
        _
      $region26: #{blurpool_conv2d_forward.1} parent=5 // pred_check_branch
        %133 = sbr.rel (%p130) target = $region28
      $region27: #{blurpool_conv2d_forward.1} parent=5 // pred_region
        %s134 = ssub.s32 %s11, 1
        %p135 = scmp.lt.s32.totalorder %s20, 1
        %s136 = scalar_select %p135, %s20, 1
        %s137 = smul.addr %s136, 40
        %s138 = smul.addr %s137, 4
        %s139 = scalar_lea.vmem %s0, %s138
        %p140 = pneg %p49
        %p141 = pneg %p46
        %p142 = pneg %p70
        %p143 = pneg %p67
        %p144 = pneg %p98
        %p145 = pneg %p95
        %s146 = sand.u32 %s85, 1
        %s147 = scalar_lea.sflag [#allocation3], %s146
        %s148 = sand.u32 %s85, 1
        %s149 = smul.addr %s148, 64
        %s150 = scalar_lea.vmem [#allocation2], %s149
        %p151 = scmp.lt.s32.totalorder %s20, 1
        %s152 = scalar_select %p151, %s20, 1
        %s153 = smul.addr %s152, 40
        %s154 = smul.addr %s153, 4
        %s155 = scalar_lea.vmem %s0, %s154
        %s156 = smul.u32 8, %s21
        %s158 = smul.u32 %s21, 16
        %s159 = smul.u32 %s158, 2
        %s160 = smul.addr %s159, 4
        %s161 = scalar_lea.vmem %s155, %s160
        %v162 = vld [vmem:[%s161] sm:$0xf]
        %v163 = vld [vmem:[%s161 + $0x4] sm:$0x1]
        %v164 = vld [vmem:[%s161 + $0x8] sm:$0xf]
        %v165 = vld [vmem:[%s161 + $0xc] sm:$0x1]
        %v166 = vld [vmem:[%s161 + $0x10] sm:$0xf]
        %v167 = vld [vmem:[%s161 + $0x14] sm:$0x1]
        %v168 = vld [vmem:[%s161 + $0x18] sm:$0xf]
        %v169 = vld [vmem:[%s161 + $0x1c] sm:$0x1]
        %v170 = vld [vmem:[%s161 + $0x20] sm:$0xf]
        %v171 = vld [vmem:[%s161 + $0x24] sm:$0x1]
        %v172 = vld [vmem:[%s161 + $0x28] sm:$0xf]
        %v173 = vld [vmem:[%s161 + $0x2c] sm:$0x1]
        %v174 = vld [vmem:[%s161 + $0x30] sm:$0xf]
        %v175 = vld [vmem:[%s161 + $0x34] sm:$0x1]
        %v176 = vld [vmem:[%s161 + $0x38] sm:$0xf]
        %v177 = vld [vmem:[%s161 + $0x3c] sm:$0x1]
        %v178 = vld [vmem:[%s161 + $0x40] sm:$0xf]
        %v179 = vld [vmem:[%s161 + $0x44] sm:$0x1]
        %v180 = vld [vmem:[%s161 + $0x48] sm:$0xf]
        %v181 = vld [vmem:[%s161 + $0x4c] sm:$0x1]
        %v182 = vld [vmem:[%s161 + $0x50] sm:$0xf]
        %v183 = vld [vmem:[%s161 + $0x54] sm:$0x1]
        %v184 = vld [vmem:[%s161 + $0x58] sm:$0xf]
        %v185 = vld [vmem:[%s161 + $0x5c] sm:$0x1]
        %v186 = vld [vmem:[%s161 + $0x60] sm:$0xf]
        %v187 = vld [vmem:[%s161 + $0x64] sm:$0x1]
        %v188 = vld [vmem:[%s161 + $0x68] sm:$0xf]
        %v189 = vld [vmem:[%s161 + $0x6c] sm:$0x1]
        %v190 = vld [vmem:[%s161 + $0x70] sm:$0xf]
        %v191 = vld [vmem:[%s161 + $0x74] sm:$0x1]
        %v192 = vld [vmem:[%s161 + $0x78] sm:$0xf]
        %v193 = vld [vmem:[%s161 + $0x7c] sm:$0x1]
        %v194 = vld [vmem:[%s161 + $0x80] sm:$0xf]
        %v195 = vld [vmem:[%s161 + $0x84] sm:$0x1]
        %v196 = vld [vmem:[%s161 + $0x88] sm:$0xf]
        %v197 = vld [vmem:[%s161 + $0x8c] sm:$0x1]
        %v198 = vld [vmem:[%s161 + $0x90] sm:$0xf]
        %v199 = vld [vmem:[%s161 + $0x94] sm:$0x1]
        %v200 = vunpack.c.l.bf16 %v162
        %v201 = vunpack.c.l.bf16 %v163
        %v202 = vunpack.c.l.bf16 %v164
        %v203 = vunpack.c.l.bf16 %v165
        %v204 = vunpack.c.l.bf16 %v166
        %v205 = vunpack.c.l.bf16 %v167
        %v206 = vunpack.c.l.bf16 %v168
        %v207 = vunpack.c.l.bf16 %v169
        %v208 = vunpack.c.l.bf16 %v170
        %v209 = vunpack.c.l.bf16 %v171
        %v210 = vunpack.c.l.bf16 %v172
        %v211 = vunpack.c.l.bf16 %v173
        %v212 = vunpack.c.l.bf16 %v174
        %v213 = vunpack.c.l.bf16 %v175
        %v214 = vunpack.c.l.bf16 %v176
        %v215 = vunpack.c.l.bf16 %v177
        %v216 = vunpack.c.l.bf16 %v178
        %v217 = vunpack.c.l.bf16 %v179
        %v218 = vunpack.c.l.bf16 %v180
        %v219 = vunpack.c.l.bf16 %v181
        %v220 = vunpack.c.l.bf16 %v182
        %v221 = vunpack.c.l.bf16 %v183
        %v222 = vunpack.c.l.bf16 %v184
        %v223 = vunpack.c.l.bf16 %v185
        %v224 = vunpack.c.l.bf16 %v186
        %v225 = vunpack.c.l.bf16 %v187
        %v226 = vunpack.c.l.bf16 %v188
        %v227 = vunpack.c.l.bf16 %v189
        %v228 = vunpack.c.l.bf16 %v190
        %v229 = vunpack.c.l.bf16 %v191
        %v230 = vunpack.c.l.bf16 %v192
        %v231 = vunpack.c.l.bf16 %v193
        %v232 = vunpack.c.l.bf16 %v194
        %v233 = vunpack.c.l.bf16 %v195
        %v234 = vunpack.c.l.bf16 %v196
        %v235 = vunpack.c.l.bf16 %v197
        %v236 = vunpack.c.l.bf16 %v198
        %v237 = vunpack.c.l.bf16 %v199
        %v238 = vmul.f32 %v202, 2.0
        %v239 = vmul.f32 %v203, 2.0
        %v240 = vmul.f32 %v204, 2.0
        %v241 = vmul.f32 %v205, 2.0
        %v242 = vmul.f32 %v206, 2.0
        %v243 = vmul.f32 %v207, 2.0
        %v244 = vmul.f32 %v208, 2.0
        %v245 = vmul.f32 %v209, 2.0
        %v246 = vmul.f32 %v210, 2.0
        %v247 = vmul.f32 %v211, 2.0
        %v248 = vmul.f32 %v212, 2.0
        %v249 = vmul.f32 %v213, 2.0
        %v250 = vmul.f32 %v214, 2.0
        %v251 = vmul.f32 %v215, 2.0
        %v252 = vmul.f32 %v216, 2.0
        %v253 = vmul.f32 %v217, 2.0
        %v254 = vmul.f32 %v218, 2.0
        %v255 = vmul.f32 %v219, 2.0
        %v256 = vmul.f32 %v220, 2.0
        %v257 = vmul.f32 %v221, 2.0
        %v258 = vmul.f32 %v222, 2.0
        %v259 = vmul.f32 %v223, 2.0
        %v260 = vmul.f32 %v224, 2.0
        %v261 = vmul.f32 %v225, 2.0
        %v262 = vmul.f32 %v226, 2.0
        %v263 = vmul.f32 %v227, 2.0
        %v264 = vmul.f32 %v228, 2.0
        %v265 = vmul.f32 %v229, 2.0
        %v266 = vmul.f32 %v230, 2.0
        %v267 = vmul.f32 %v231, 2.0
        %v268 = vmul.f32 %v232, 2.0
        %v269 = vmul.f32 %v233, 2.0
        %v270 = vmul.f32 %v234, 2.0
        %v271 = vmul.f32 %v235, 2.0
        %v272 = vadd.f32 %v200, %v238
        %v273 = vadd.f32 %v201, %v239
        %v274 = vadd.f32 %v202, %v240
        %v275 = vadd.f32 %v203, %v241
        %v276 = vadd.f32 %v204, %v242
        %v277 = vadd.f32 %v205, %v243
        %v278 = vadd.f32 %v206, %v244
        %v279 = vadd.f32 %v207, %v245
        %v280 = vadd.f32 %v208, %v246
        %v281 = vadd.f32 %v209, %v247
        %v282 = vadd.f32 %v210, %v248
        %v283 = vadd.f32 %v211, %v249
        %v284 = vadd.f32 %v212, %v250
        %v285 = vadd.f32 %v213, %v251
        %v286 = vadd.f32 %v214, %v252
        %v287 = vadd.f32 %v215, %v253
        %v288 = vadd.f32 %v216, %v254
        %v289 = vadd.f32 %v217, %v255
        %v290 = vadd.f32 %v218, %v256
        %v291 = vadd.f32 %v219, %v257
        %v292 = vadd.f32 %v220, %v258
        %v293 = vadd.f32 %v221, %v259
        %v294 = vadd.f32 %v222, %v260
        %v295 = vadd.f32 %v223, %v261
        %v296 = vadd.f32 %v224, %v262
        %v297 = vadd.f32 %v225, %v263
        %v298 = vadd.f32 %v226, %v264
        %v299 = vadd.f32 %v227, %v265
        %v300 = vadd.f32 %v228, %v266
        %v301 = vadd.f32 %v229, %v267
        %v302 = vadd.f32 %v230, %v268
        %v303 = vadd.f32 %v231, %v269
        %v304 = vadd.f32 %v232, %v270
        %v305 = vadd.f32 %v233, %v271
        %v306 = vadd.f32 %v272, %v204
        %v307 = vadd.f32 %v273, %v205
        %v308 = vadd.f32 %v274, %v206
        %v309 = vadd.f32 %v275, %v207
        %v310 = vadd.f32 %v276, %v208
        %v311 = vadd.f32 %v277, %v209
        %v312 = vadd.f32 %v278, %v210
        %v313 = vadd.f32 %v279, %v211
        %v314 = vadd.f32 %v280, %v212
        %v315 = vadd.f32 %v281, %v213
        %v316 = vadd.f32 %v282, %v214
        %v317 = vadd.f32 %v283, %v215
        %v318 = vadd.f32 %v284, %v216
        %v319 = vadd.f32 %v285, %v217
        %v320 = vadd.f32 %v286, %v218
        %v321 = vadd.f32 %v287, %v219
        %v322 = vadd.f32 %v288, %v220
        %v323 = vadd.f32 %v289, %v221
        %v324 = vadd.f32 %v290, %v222
        %v325 = vadd.f32 %v291, %v223
        %v326 = vadd.f32 %v292, %v224
        %v327 = vadd.f32 %v293, %v225
        %v328 = vadd.f32 %v294, %v226
        %v329 = vadd.f32 %v295, %v227
        %v330 = vadd.f32 %v296, %v228
        %v331 = vadd.f32 %v297, %v229
        %v332 = vadd.f32 %v298, %v230
        %v333 = vadd.f32 %v299, %v231
        %v334 = vadd.f32 %v300, %v232
        %v335 = vadd.f32 %v301, %v233
        %v336 = vadd.f32 %v302, %v234
        %v337 = vadd.f32 %v303, %v235
        %v338 = vadd.f32 %v304, %v236
        %v339 = vadd.f32 %v305, %v237
        %p340 = scmp.gt.s32.totalorder %s158, 0
        %s341 = scalar_select %p340, 1, 0
        %s342 = scvt.s32.f32 %s341
        %v343 = vstv %s342
        %v344 = vmul.f32 %v306, %v343
        %v345 = vmul.f32 %v307, %v343
        %v346 = vmul.f32 %v344, 2.0
        %v347 = vmul.f32 %v345, 2.0
        %v348 = vmul.f32 %v308, 2.0
        %v349 = vmul.f32 %v309, 2.0
        %v350 = vmul.f32 %v310, 2.0
        %v351 = vmul.f32 %v311, 2.0
        %v352 = vmul.f32 %v312, 2.0
        %v353 = vmul.f32 %v313, 2.0
        %v354 = vmul.f32 %v314, 2.0
        %v355 = vmul.f32 %v315, 2.0
        %v356 = vmul.f32 %v316, 2.0
        %v357 = vmul.f32 %v317, 2.0
        %v358 = vmul.f32 %v318, 2.0
        %v359 = vmul.f32 %v319, 2.0
        %v360 = vmul.f32 %v320, 2.0
        %v361 = vmul.f32 %v321, 2.0
        %v362 = vmul.f32 %v322, 2.0
        %v363 = vmul.f32 %v323, 2.0
        %v364 = vmul.f32 %v324, 2.0
        %v365 = vmul.f32 %v325, 2.0
        %v366 = vmul.f32 %v326, 2.0
        %v367 = vmul.f32 %v327, 2.0
        %v368 = vmul.f32 %v328, 2.0
        %v369 = vmul.f32 %v329, 2.0
        %v370 = vmul.f32 %v330, 2.0
        %v371 = vmul.f32 %v331, 2.0
        %v372 = vmul.f32 %v332, 2.0
        %v373 = vmul.f32 %v333, 2.0
        %v374 = vmul.f32 %v334, 2.0
        %v375 = vmul.f32 %v335, 2.0
        %v376 = vmul.f32 %v336, 2.0
        %v377 = vmul.f32 %v337, 2.0
        %v378 = vmul.f32 %v338, 2.0
        %v379 = vmul.f32 %v339, 2.0
        %414 = vrot.lane.b32.xlu0 %v346, 112
        %v415 = vpop.permute.xlu0 %414
        %416 = vrot.lane.b32.xlu0 %v347, 112
        %v417 = vpop.permute.xlu0 %416
        %418 = vrot.lane.b32.xlu0 %v348, 112
        %v419 = vpop.permute.xlu0 %418
        %420 = vrot.lane.b32.xlu0 %v349, 112
        %v421 = vpop.permute.xlu0 %420
        %422 = vrot.lane.b32.xlu0 %v350, 112
        %v423 = vpop.permute.xlu0 %422
        %424 = vrot.lane.b32.xlu0 %v351, 112
        %v425 = vpop.permute.xlu0 %424
        %426 = vrot.lane.b32.xlu0 %v352, 112
        %v427 = vpop.permute.xlu0 %426
        %428 = vrot.lane.b32.xlu0 %v353, 112
        %v429 = vpop.permute.xlu0 %428
        %430 = vrot.lane.b32.xlu0 %v354, 112
        %v431 = vpop.permute.xlu0 %430
        %432 = vrot.lane.b32.xlu0 %v355, 112
        %v433 = vpop.permute.xlu0 %432
        %434 = vrot.lane.b32.xlu0 %v356, 112
        %v435 = vpop.permute.xlu0 %434
        %436 = vrot.lane.b32.xlu0 %v357, 112
        %v437 = vpop.permute.xlu0 %436
        %438 = vrot.lane.b32.xlu0 %v358, 112
        %v439 = vpop.permute.xlu0 %438
        %440 = vrot.lane.b32.xlu0 %v359, 112
        %v441 = vpop.permute.xlu0 %440
        %442 = vrot.lane.b32.xlu0 %v360, 112
        %v443 = vpop.permute.xlu0 %442
        %444 = vrot.lane.b32.xlu0 %v361, 112
        %v445 = vpop.permute.xlu0 %444
        %446 = vrot.lane.b32.xlu0 %v362, 112
        %v447 = vpop.permute.xlu0 %446
        %448 = vrot.lane.b32.xlu0 %v363, 112
        %v449 = vpop.permute.xlu0 %448
        %450 = vrot.lane.b32.xlu0 %v364, 112
        %v451 = vpop.permute.xlu0 %450
        %452 = vrot.lane.b32.xlu0 %v365, 112
        %v453 = vpop.permute.xlu0 %452
        %454 = vrot.lane.b32.xlu0 %v366, 112
        %v455 = vpop.permute.xlu0 %454
        %456 = vrot.lane.b32.xlu0 %v367, 112
        %v457 = vpop.permute.xlu0 %456
        %458 = vrot.lane.b32.xlu0 %v368, 112
        %v459 = vpop.permute.xlu0 %458
        %460 = vrot.lane.b32.xlu0 %v369, 112
        %v461 = vpop.permute.xlu0 %460
        %462 = vrot.lane.b32.xlu0 %v370, 112
        %v463 = vpop.permute.xlu0 %462
        %464 = vrot.lane.b32.xlu0 %v371, 112
        %v465 = vpop.permute.xlu0 %464
        %466 = vrot.lane.b32.xlu0 %v372, 112
        %v467 = vpop.permute.xlu0 %466
        %468 = vrot.lane.b32.xlu0 %v373, 112
        %v469 = vpop.permute.xlu0 %468
        %470 = vrot.lane.b32.xlu0 %v374, 112
        %v471 = vpop.permute.xlu0 %470
        %472 = vrot.lane.b32.xlu0 %v375, 112
        %v473 = vpop.permute.xlu0 %472
        %474 = vrot.lane.b32.xlu0 %v376, 112
        %v475 = vpop.permute.xlu0 %474
        %476 = vrot.lane.b32.xlu0 %v377, 112
        %v477 = vpop.permute.xlu0 %476
        %478 = vrot.lane.b32.xlu0 %v378, 112
        %v479 = vpop.permute.xlu0 %478
        %480 = vrot.lane.b32.xlu0 %v379, 112
        %v481 = vpop.permute.xlu0 %480
        %v516 = vadd.f32 %v344, %v415
        %v517 = vadd.f32 %v345, %v417
        %v518 = vadd.f32 %v308, %v419
        %v519 = vadd.f32 %v309, %v421
        %v520 = vadd.f32 %v310, %v423
        %v521 = vadd.f32 %v311, %v425
        %v522 = vadd.f32 %v312, %v427
        %v523 = vadd.f32 %v313, %v429
        %v524 = vadd.f32 %v314, %v431
        %v525 = vadd.f32 %v315, %v433
        %v526 = vadd.f32 %v316, %v435
        %v527 = vadd.f32 %v317, %v437
        %v528 = vadd.f32 %v318, %v439
        %v529 = vadd.f32 %v319, %v441
        %v530 = vadd.f32 %v320, %v443
        %v531 = vadd.f32 %v321, %v445
        %v532 = vadd.f32 %v322, %v447
        %v533 = vadd.f32 %v323, %v449
        %v534 = vadd.f32 %v324, %v451
        %v535 = vadd.f32 %v325, %v453
        %v536 = vadd.f32 %v326, %v455
        %v537 = vadd.f32 %v327, %v457
        %v538 = vadd.f32 %v328, %v459
        %v539 = vadd.f32 %v329, %v461
        %v540 = vadd.f32 %v330, %v463
        %v541 = vadd.f32 %v331, %v465
        %v542 = vadd.f32 %v332, %v467
        %v543 = vadd.f32 %v333, %v469
        %v544 = vadd.f32 %v334, %v471
        %v545 = vadd.f32 %v335, %v473
        %v546 = vadd.f32 %v336, %v475
        %v547 = vadd.f32 %v337, %v477
        %v548 = vadd.f32 %v338, %v479
        %v549 = vadd.f32 %v339, %v481
        %vm584 = vcmask 1046528
        %v585 = vrot.slane %v344, 1
        %v586 = vrot.slane %v345, 1
        %v587 = vsel %vm584, %v585, %v586
        %v588 = vrot.slane %v308, 1
        %v589 = vrot.slane %v309, 1
        %v590 = vsel %vm584, %v588, %v589
        %v591 = vrot.slane %v310, 1
        %v592 = vrot.slane %v311, 1
        %v593 = vsel %vm584, %v591, %v592
        %v594 = vrot.slane %v312, 1
        %v595 = vrot.slane %v313, 1
        %v596 = vsel %vm584, %v594, %v595
        %v597 = vrot.slane %v314, 1
        %v598 = vrot.slane %v315, 1
        %v599 = vsel %vm584, %v597, %v598
        %v600 = vrot.slane %v316, 1
        %v601 = vrot.slane %v317, 1
        %v602 = vsel %vm584, %v600, %v601
        %v603 = vrot.slane %v318, 1
        %v604 = vrot.slane %v319, 1
        %v605 = vsel %vm584, %v603, %v604
        %v606 = vrot.slane %v320, 1
        %v607 = vrot.slane %v321, 1
        %v608 = vsel %vm584, %v606, %v607
        %v609 = vrot.slane %v322, 1
        %v610 = vrot.slane %v323, 1
        %v611 = vsel %vm584, %v609, %v610
        %v612 = vrot.slane %v324, 1
        %v613 = vrot.slane %v325, 1
        %v614 = vsel %vm584, %v612, %v613
        %v615 = vrot.slane %v326, 1
        %v616 = vrot.slane %v327, 1
        %v617 = vsel %vm584, %v615, %v616
        %v618 = vrot.slane %v328, 1
        %v619 = vrot.slane %v329, 1
        %v620 = vsel %vm584, %v618, %v619
        %v621 = vrot.slane %v330, 1
        %v622 = vrot.slane %v331, 1
        %v623 = vsel %vm584, %v621, %v622
        %v624 = vrot.slane %v332, 1
        %v625 = vrot.slane %v333, 1
        %v626 = vsel %vm584, %v624, %v625
        %v627 = vrot.slane %v334, 1
        %v628 = vrot.slane %v335, 1
        %v629 = vsel %vm584, %v627, %v628
        %v630 = vrot.slane %v336, 1
        %v631 = vrot.slane %v337, 1
        %v632 = vsel %vm584, %v630, %v631
        %v633 = vrot.slane %v338, 1
        %v634 = vrot.slane %v339, 1
        %v635 = vsel %vm584, %v633, %v634
        %v670 = vadd.f32 %v516, %v587
        %v671 = vadd.f32 %v517, %v586
        %v672 = vadd.f32 %v518, %v590
        %v673 = vadd.f32 %v519, %v589
        %v674 = vadd.f32 %v520, %v593
        %v675 = vadd.f32 %v521, %v592
        %v676 = vadd.f32 %v522, %v596
        %v677 = vadd.f32 %v523, %v595
        %v678 = vadd.f32 %v524, %v599
        %v679 = vadd.f32 %v525, %v598
        %v680 = vadd.f32 %v526, %v602
        %v681 = vadd.f32 %v527, %v601
        %v682 = vadd.f32 %v528, %v605
        %v683 = vadd.f32 %v529, %v604
        %v684 = vadd.f32 %v530, %v608
        %v685 = vadd.f32 %v531, %v607
        %v686 = vadd.f32 %v532, %v611
        %v687 = vadd.f32 %v533, %v610
        %v688 = vadd.f32 %v534, %v614
        %v689 = vadd.f32 %v535, %v613
        %v690 = vadd.f32 %v536, %v617
        %v691 = vadd.f32 %v537, %v616
        %v692 = vadd.f32 %v538, %v620
        %v693 = vadd.f32 %v539, %v619
        %v694 = vadd.f32 %v540, %v623
        %v695 = vadd.f32 %v541, %v622
        %v696 = vadd.f32 %v542, %v626
        %v697 = vadd.f32 %v543, %v625
        %v698 = vadd.f32 %v544, %v629
        %v699 = vadd.f32 %v545, %v628
        %v700 = vadd.f32 %v546, %v632
        %v701 = vadd.f32 %v547, %v631
        %v702 = vadd.f32 %v548, %v635
        %v703 = vadd.f32 %v549, %v634
        %v704 = vmul.f32 %v670, 0.0625
        %v705 = vmul.f32 %v671, 0.0625
        %v706 = vmul.f32 %v672, 0.0625
        %v707 = vmul.f32 %v673, 0.0625
        %v708 = vmul.f32 %v674, 0.0625
        %v709 = vmul.f32 %v675, 0.0625
        %v710 = vmul.f32 %v676, 0.0625
        %v711 = vmul.f32 %v677, 0.0625
        %v712 = vmul.f32 %v678, 0.0625
        %v713 = vmul.f32 %v679, 0.0625
        %v714 = vmul.f32 %v680, 0.0625
        %v715 = vmul.f32 %v681, 0.0625
        %v716 = vmul.f32 %v682, 0.0625
        %v717 = vmul.f32 %v683, 0.0625
        %v718 = vmul.f32 %v684, 0.0625
        %v719 = vmul.f32 %v685, 0.0625
        %v720 = vmul.f32 %v686, 0.0625
        %v721 = vmul.f32 %v687, 0.0625
        %v722 = vmul.f32 %v688, 0.0625
        %v723 = vmul.f32 %v689, 0.0625
        %v724 = vmul.f32 %v690, 0.0625
        %v725 = vmul.f32 %v691, 0.0625
        %v726 = vmul.f32 %v692, 0.0625
        %v727 = vmul.f32 %v693, 0.0625
        %v728 = vmul.f32 %v694, 0.0625
        %v729 = vmul.f32 %v695, 0.0625
        %v730 = vmul.f32 %v696, 0.0625
        %v731 = vmul.f32 %v697, 0.0625
        %v732 = vmul.f32 %v698, 0.0625
        %v733 = vmul.f32 %v699, 0.0625
        %v734 = vmul.f32 %v700, 0.0625
        %v735 = vmul.f32 %v701, 0.0625
        %v736 = vmul.f32 %v702, 0.0625
        %v737 = vmul.f32 %v703, 0.0625
        %v738 = vrot.slane %v346, 1
        %v739 = vrot.slane %v347, 1
        %v740 = vsel %vm584, %v738, %v739
        %v741 = vrot.slane %v348, 1
        %v742 = vrot.slane %v349, 1
        %v743 = vsel %vm584, %v741, %v742
        %v744 = vrot.slane %v350, 1
        %v745 = vrot.slane %v351, 1
        %v746 = vsel %vm584, %v744, %v745
        %v747 = vrot.slane %v352, 1
        %v748 = vrot.slane %v353, 1
        %v749 = vsel %vm584, %v747, %v748
        %v750 = vrot.slane %v354, 1
        %v751 = vrot.slane %v355, 1
        %v752 = vsel %vm584, %v750, %v751
        %v753 = vrot.slane %v356, 1
        %v754 = vrot.slane %v357, 1
        %v755 = vsel %vm584, %v753, %v754
        %v756 = vrot.slane %v358, 1
        %v757 = vrot.slane %v359, 1
        %v758 = vsel %vm584, %v756, %v757
        %v759 = vrot.slane %v360, 1
        %v760 = vrot.slane %v361, 1
        %v761 = vsel %vm584, %v759, %v760
        %v762 = vrot.slane %v362, 1
        %v763 = vrot.slane %v363, 1
        %v764 = vsel %vm584, %v762, %v763
        %v765 = vrot.slane %v364, 1
        %v766 = vrot.slane %v365, 1
        %v767 = vsel %vm584, %v765, %v766
        %v768 = vrot.slane %v366, 1
        %v769 = vrot.slane %v367, 1
        %v770 = vsel %vm584, %v768, %v769
        %v771 = vrot.slane %v368, 1
        %v772 = vrot.slane %v369, 1
        %v773 = vsel %vm584, %v771, %v772
        %v774 = vrot.slane %v370, 1
        %v775 = vrot.slane %v371, 1
        %v776 = vsel %vm584, %v774, %v775
        %v777 = vrot.slane %v372, 1
        %v778 = vrot.slane %v373, 1
        %v779 = vsel %vm584, %v777, %v778
        %v780 = vrot.slane %v374, 1
        %v781 = vrot.slane %v375, 1
        %v782 = vsel %vm584, %v780, %v781
        %v783 = vrot.slane %v376, 1
        %v784 = vrot.slane %v377, 1
        %v785 = vsel %vm584, %v783, %v784
        %v786 = vrot.slane %v378, 1
        %v787 = vrot.slane %v379, 1
        %v788 = vsel %vm584, %v786, %v787
        %789 = vrot.lane.b32.xlu0 %v740, 16
        %v790 = vpop.permute.xlu0 %789
        %791 = vrot.lane.b32.xlu0 %v743, 16
        %v792 = vpop.permute.xlu0 %791
        %793 = vrot.lane.b32.xlu0 %v746, 16
        %v794 = vpop.permute.xlu0 %793
        %795 = vrot.lane.b32.xlu0 %v749, 16
        %v796 = vpop.permute.xlu0 %795
        %797 = vrot.lane.b32.xlu0 %v752, 16
        %v798 = vpop.permute.xlu0 %797
        %799 = vrot.lane.b32.xlu0 %v755, 16
        %v800 = vpop.permute.xlu0 %799
        %801 = vrot.lane.b32.xlu0 %v758, 16
        %v802 = vpop.permute.xlu0 %801
        %803 = vrot.lane.b32.xlu0 %v761, 16
        %v804 = vpop.permute.xlu0 %803
        %805 = vrot.lane.b32.xlu0 %v764, 16
        %v806 = vpop.permute.xlu0 %805
        %807 = vrot.lane.b32.xlu0 %v767, 16
        %v808 = vpop.permute.xlu0 %807
        %809 = vrot.lane.b32.xlu0 %v770, 16
        %v810 = vpop.permute.xlu0 %809
        %811 = vrot.lane.b32.xlu0 %v773, 16
        %v812 = vpop.permute.xlu0 %811
        %813 = vrot.lane.b32.xlu0 %v776, 16
        %v814 = vpop.permute.xlu0 %813
        %815 = vrot.lane.b32.xlu0 %v779, 16
        %v816 = vpop.permute.xlu0 %815
        %817 = vrot.lane.b32.xlu0 %v782, 16
        %v818 = vpop.permute.xlu0 %817
        %819 = vrot.lane.b32.xlu0 %v785, 16
        %v820 = vpop.permute.xlu0 %819
        %821 = vrot.lane.b32.xlu0 %v788, 16
        %v822 = vpop.permute.xlu0 %821
        %v840 = vadd.f32 %v344, %v790
        %v841 = vadd.f32 %v308, %v792
        %v842 = vadd.f32 %v310, %v794
        %v843 = vadd.f32 %v312, %v796
        %v844 = vadd.f32 %v314, %v798
        %v845 = vadd.f32 %v316, %v800
        %v846 = vadd.f32 %v318, %v802
        %v847 = vadd.f32 %v320, %v804
        %v848 = vadd.f32 %v322, %v806
        %v849 = vadd.f32 %v324, %v808
        %v850 = vadd.f32 %v326, %v810
        %v851 = vadd.f32 %v328, %v812
        %v852 = vadd.f32 %v330, %v814
        %v853 = vadd.f32 %v332, %v816
        %v854 = vadd.f32 %v334, %v818
        %v855 = vadd.f32 %v336, %v820
        %v856 = vadd.f32 %v338, %v822
        %v857 = vadd.f32 %v840, %v587
        %v858 = vadd.f32 %v841, %v590
        %v859 = vadd.f32 %v842, %v593
        %v860 = vadd.f32 %v843, %v596
        %v861 = vadd.f32 %v844, %v599
        %v862 = vadd.f32 %v845, %v602
        %v863 = vadd.f32 %v846, %v605
        %v864 = vadd.f32 %v847, %v608
        %v865 = vadd.f32 %v848, %v611
        %v866 = vadd.f32 %v849, %v614
        %v867 = vadd.f32 %v850, %v617
        %v868 = vadd.f32 %v851, %v620
        %v869 = vadd.f32 %v852, %v623
        %v870 = vadd.f32 %v853, %v626
        %v871 = vadd.f32 %v854, %v629
        %v872 = vadd.f32 %v855, %v632
        %v873 = vadd.f32 %v856, %v635
        %v874 = vmul.f32 %v857, 0.0625
        %v875 = vmul.f32 %v858, 0.0625
        %v876 = vmul.f32 %v859, 0.0625
        %v877 = vmul.f32 %v860, 0.0625
        %v878 = vmul.f32 %v861, 0.0625
        %v879 = vmul.f32 %v862, 0.0625
        %v880 = vmul.f32 %v863, 0.0625
        %v881 = vmul.f32 %v864, 0.0625
        %v882 = vmul.f32 %v865, 0.0625
        %v883 = vmul.f32 %v866, 0.0625
        %v884 = vmul.f32 %v867, 0.0625
        %v885 = vmul.f32 %v868, 0.0625
        %v886 = vmul.f32 %v869, 0.0625
        %v887 = vmul.f32 %v870, 0.0625
        %v888 = vmul.f32 %v871, 0.0625
        %v889 = vmul.f32 %v872, 0.0625
        %v890 = vmul.f32 %v873, 0.0625
        %vm891 = vcmask 1040384
        %v892 = vsel %vm891, 0.0, %v704
        %v893 = vsel %vm891, 0.0, %v706
        %v894 = vsel %vm891, 0.0, %v708
        %v895 = vsel %vm891, 0.0, %v710
        %v896 = vsel %vm891, 0.0, %v712
        %v897 = vsel %vm891, 0.0, %v714
        %v898 = vsel %vm891, 0.0, %v716
        %v899 = vsel %vm891, 0.0, %v718
        %v900 = vsel %vm891, 0.0, %v720
        %v901 = vsel %vm891, 0.0, %v722
        %v902 = vsel %vm891, 0.0, %v724
        %v903 = vsel %vm891, 0.0, %v726
        %v904 = vsel %vm891, 0.0, %v728
        %v905 = vsel %vm891, 0.0, %v730
        %v906 = vsel %vm891, 0.0, %v732
        %v907 = vsel %vm891, 0.0, %v734
        %v908 = vsel %vm891, 0.0, %v736
        %v909 = vpack.c.bf16 %v705, %v892
        %v910 = vpack.c.bf16 %v707, %v893
        %v911 = vpack.c.bf16 %v709, %v894
        %v912 = vpack.c.bf16 %v711, %v895
        %v913 = vpack.c.bf16 %v713, %v896
        %v914 = vpack.c.bf16 %v715, %v897
        %v915 = vpack.c.bf16 %v717, %v898
        %v916 = vpack.c.bf16 %v719, %v899
        %v917 = vpack.c.bf16 %v721, %v900
        %v918 = vpack.c.bf16 %v723, %v901
        %v919 = vpack.c.bf16 %v725, %v902
        %v920 = vpack.c.bf16 %v727, %v903
        %v921 = vpack.c.bf16 %v729, %v904
        %v922 = vpack.c.bf16 %v731, %v905
        %v923 = vpack.c.bf16 %v733, %v906
        %v924 = vpack.c.bf16 %v735, %v907
        %v925 = vpack.c.bf16 %v737, %v908
        %v926 = vpack.c.bf16 %v874, %v874
        %v927 = vpack.c.bf16 %v875, %v875
        %v928 = vpack.c.bf16 %v876, %v876
        %v929 = vpack.c.bf16 %v877, %v877
        %v930 = vpack.c.bf16 %v878, %v878
        %v931 = vpack.c.bf16 %v879, %v879
        %v932 = vpack.c.bf16 %v880, %v880
        %v933 = vpack.c.bf16 %v881, %v881
        %v934 = vpack.c.bf16 %v882, %v882
        %v935 = vpack.c.bf16 %v883, %v883
        %v936 = vpack.c.bf16 %v884, %v884
        %v937 = vpack.c.bf16 %v885, %v885
        %v938 = vpack.c.bf16 %v886, %v886
        %v939 = vpack.c.bf16 %v887, %v887
        %v940 = vpack.c.bf16 %v888, %v888
        %v941 = vpack.c.bf16 %v889, %v889
        %v942 = vpack.c.bf16 %v890, %v890
        %v944 = vshrl.u32 %v909, 16
        %v946 = vshll.u32 %v909, 16
        %v948 = vrot.slane %v946, 1
        %v949 = vor.u32 %v944, %v948
        %v951 = vshrl.u32 %v911, 16
        %v953 = vshll.u32 %v911, 16
        %v955 = vrot.slane %v953, 1
        %v956 = vor.u32 %v951, %v955
        %v958 = vshrl.u32 %v913, 16
        %v960 = vshll.u32 %v913, 16
        %v962 = vrot.slane %v960, 1
        %v963 = vor.u32 %v958, %v962
        %v965 = vshrl.u32 %v915, 16
        %v967 = vshll.u32 %v915, 16
        %v969 = vrot.slane %v967, 1
        %v970 = vor.u32 %v965, %v969
        %v972 = vshrl.u32 %v917, 16
        %v974 = vshll.u32 %v917, 16
        %v976 = vrot.slane %v974, 1
        %v977 = vor.u32 %v972, %v976
        %v979 = vshrl.u32 %v919, 16
        %v981 = vshll.u32 %v919, 16
        %v983 = vrot.slane %v981, 1
        %v984 = vor.u32 %v979, %v983
        %v986 = vshrl.u32 %v921, 16
        %v988 = vshll.u32 %v921, 16
        %v990 = vrot.slane %v988, 1
        %v991 = vor.u32 %v986, %v990
        %v993 = vshrl.u32 %v923, 16
        %v995 = vshll.u32 %v923, 16
        %v997 = vrot.slane %v995, 1
        %v998 = vor.u32 %v993, %v997
        %999 = vrot.lane.b32.xlu0 %v949, 32
        %v1000 = vpop.permute.xlu0 %999
        %1001 = vrot.lane.b32.xlu0 %v956, 32
        %v1002 = vpop.permute.xlu0 %1001
        %1003 = vrot.lane.b32.xlu0 %v963, 32
        %v1004 = vpop.permute.xlu0 %1003
        %1005 = vrot.lane.b32.xlu0 %v970, 32
        %v1006 = vpop.permute.xlu0 %1005
        %1007 = vrot.lane.b32.xlu0 %v977, 32
        %v1008 = vpop.permute.xlu0 %1007
        %1009 = vrot.lane.b32.xlu0 %v984, 32
        %v1010 = vpop.permute.xlu0 %1009
        %1011 = vrot.lane.b32.xlu0 %v991, 32
        %v1012 = vpop.permute.xlu0 %1011
        %1013 = vrot.lane.b32.xlu0 %v998, 32
        %v1014 = vpop.permute.xlu0 %1013
        %1023 = vrot.lane.b32.xlu0 %v910, 48
        %v1024 = vpop.permute.xlu0 %1023
        %1025 = vrot.lane.b32.xlu0 %v912, 48
        %v1026 = vpop.permute.xlu0 %1025
        %1027 = vrot.lane.b32.xlu0 %v914, 48
        %v1028 = vpop.permute.xlu0 %1027
        %1029 = vrot.lane.b32.xlu0 %v916, 48
        %v1030 = vpop.permute.xlu0 %1029
        %1031 = vrot.lane.b32.xlu0 %v918, 48
        %v1032 = vpop.permute.xlu0 %1031
        %1033 = vrot.lane.b32.xlu0 %v920, 48
        %v1034 = vpop.permute.xlu0 %1033
        %1035 = vrot.lane.b32.xlu0 %v922, 48
        %v1036 = vpop.permute.xlu0 %1035
        %1037 = vrot.lane.b32.xlu0 %v924, 48
        %v1038 = vpop.permute.xlu0 %1037
        %1047 = vrot.lane.b32.xlu0 %v927, 48
        %v1048 = vpop.permute.xlu0 %1047
        %1049 = vrot.lane.b32.xlu0 %v929, 48
        %v1050 = vpop.permute.xlu0 %1049
        %1051 = vrot.lane.b32.xlu0 %v931, 48
        %v1052 = vpop.permute.xlu0 %1051
        %1053 = vrot.lane.b32.xlu0 %v933, 48
        %v1054 = vpop.permute.xlu0 %1053
        %1055 = vrot.lane.b32.xlu0 %v935, 48
        %v1056 = vpop.permute.xlu0 %1055
        %1057 = vrot.lane.b32.xlu0 %v937, 48
        %v1058 = vpop.permute.xlu0 %1057
        %1059 = vrot.lane.b32.xlu0 %v939, 48
        %v1060 = vpop.permute.xlu0 %1059
        %1061 = vrot.lane.b32.xlu0 %v941, 48
        %v1062 = vpop.permute.xlu0 %1061
        %v1064 = vshrl.u32 %v910, 16
        %v1066 = vshll.u32 %v910, 16
        %v1068 = vrot.slane %v1066, 1
        %v1069 = vor.u32 %v1064, %v1068
        %v1071 = vshrl.u32 %v912, 16
        %v1073 = vshll.u32 %v912, 16
        %v1075 = vrot.slane %v1073, 1
        %v1076 = vor.u32 %v1071, %v1075
        %v1078 = vshrl.u32 %v914, 16
        %v1080 = vshll.u32 %v914, 16
        %v1082 = vrot.slane %v1080, 1
        %v1083 = vor.u32 %v1078, %v1082
        %v1085 = vshrl.u32 %v916, 16
        %v1087 = vshll.u32 %v916, 16
        %v1089 = vrot.slane %v1087, 1
        %v1090 = vor.u32 %v1085, %v1089
        %v1092 = vshrl.u32 %v918, 16
        %v1094 = vshll.u32 %v918, 16
        %v1096 = vrot.slane %v1094, 1
        %v1097 = vor.u32 %v1092, %v1096
        %v1099 = vshrl.u32 %v920, 16
        %v1101 = vshll.u32 %v920, 16
        %v1103 = vrot.slane %v1101, 1
        %v1104 = vor.u32 %v1099, %v1103
        %v1106 = vshrl.u32 %v922, 16
        %v1108 = vshll.u32 %v922, 16
        %v1110 = vrot.slane %v1108, 1
        %v1111 = vor.u32 %v1106, %v1110
        %v1113 = vshrl.u32 %v924, 16
        %v1115 = vshll.u32 %v924, 16
        %v1117 = vrot.slane %v1115, 1
        %v1118 = vor.u32 %v1113, %v1117
        %1119 = vrot.lane.b32.xlu0 %v1069, 80
        %v1120 = vpop.permute.xlu0 %1119
        %1121 = vrot.lane.b32.xlu0 %v1076, 80
        %v1122 = vpop.permute.xlu0 %1121
        %1123 = vrot.lane.b32.xlu0 %v1083, 80
        %v1124 = vpop.permute.xlu0 %1123
        %1125 = vrot.lane.b32.xlu0 %v1090, 80
        %v1126 = vpop.permute.xlu0 %1125
        %1127 = vrot.lane.b32.xlu0 %v1097, 80
        %v1128 = vpop.permute.xlu0 %1127
        %1129 = vrot.lane.b32.xlu0 %v1104, 80
        %v1130 = vpop.permute.xlu0 %1129
        %1131 = vrot.lane.b32.xlu0 %v1111, 80
        %v1132 = vpop.permute.xlu0 %1131
        %1133 = vrot.lane.b32.xlu0 %v1118, 80
        %v1134 = vpop.permute.xlu0 %1133
        %1143 = vrot.lane.b32.xlu0 %v911, 96
        %v1144 = vpop.permute.xlu0 %1143
        %1145 = vrot.lane.b32.xlu0 %v913, 96
        %v1146 = vpop.permute.xlu0 %1145
        %1147 = vrot.lane.b32.xlu0 %v915, 96
        %v1148 = vpop.permute.xlu0 %1147
        %1149 = vrot.lane.b32.xlu0 %v917, 96
        %v1150 = vpop.permute.xlu0 %1149
        %1151 = vrot.lane.b32.xlu0 %v919, 96
        %v1152 = vpop.permute.xlu0 %1151
        %1153 = vrot.lane.b32.xlu0 %v921, 96
        %v1154 = vpop.permute.xlu0 %1153
        %1155 = vrot.lane.b32.xlu0 %v923, 96
        %v1156 = vpop.permute.xlu0 %1155
        %1157 = vrot.lane.b32.xlu0 %v925, 96
        %v1158 = vpop.permute.xlu0 %1157
        %1167 = vrot.lane.b32.xlu0 %v928, 96
        %v1168 = vpop.permute.xlu0 %1167
        %1169 = vrot.lane.b32.xlu0 %v930, 96
        %v1170 = vpop.permute.xlu0 %1169
        %1171 = vrot.lane.b32.xlu0 %v932, 96
        %v1172 = vpop.permute.xlu0 %1171
        %1173 = vrot.lane.b32.xlu0 %v934, 96
        %v1174 = vpop.permute.xlu0 %1173
        %1175 = vrot.lane.b32.xlu0 %v936, 96
        %v1176 = vpop.permute.xlu0 %1175
        %1177 = vrot.lane.b32.xlu0 %v938, 96
        %v1178 = vpop.permute.xlu0 %1177
        %1179 = vrot.lane.b32.xlu0 %v940, 96
        %v1180 = vpop.permute.xlu0 %1179
        %1181 = vrot.lane.b32.xlu0 %v942, 96
        %v1182 = vpop.permute.xlu0 %1181
        %v1184 = vshrl.u32 %v925, 16
        %v1186 = vshll.u32 %v925, 16
        %v1188 = vrot.slane %v1186, 1
        %v1189 = vor.u32 %v1184, %v1188
        %vm1190 = vcmask 130048
        %v1192 = vsel %vm1190, %v909, %v926
        %v1194 = vsel %vm1190, %v911, %v928
        %v1196 = vsel %vm1190, %v913, %v930
        %v1198 = vsel %vm1190, %v915, %v932
        %v1200 = vsel %vm1190, %v917, %v934
        %v1202 = vsel %vm1190, %v919, %v936
        %v1204 = vsel %vm1190, %v921, %v938
        %v1206 = vsel %vm1190, %v923, %v940
        %vm1207 = vcmask 261120
        %v1209 = vsel %vm1207, %v1192, %v1000
        %v1211 = vsel %vm1207, %v1194, %v1002
        %v1213 = vsel %vm1207, %v1196, %v1004
        %v1215 = vsel %vm1207, %v1198, %v1006
        %v1217 = vsel %vm1207, %v1200, %v1008
        %v1219 = vsel %vm1207, %v1202, %v1010
        %v1221 = vsel %vm1207, %v1204, %v1012
        %v1223 = vsel %vm1207, %v1206, %v1014
        %vm1224 = vcmask 392192
        %v1226 = vsel %vm1224, %v1209, %v1024
        %v1228 = vsel %vm1224, %v1211, %v1026
        %v1230 = vsel %vm1224, %v1213, %v1028
        %v1232 = vsel %vm1224, %v1215, %v1030
        %v1234 = vsel %vm1224, %v1217, %v1032
        %v1236 = vsel %vm1224, %v1219, %v1034
        %v1238 = vsel %vm1224, %v1221, %v1036
        %v1240 = vsel %vm1224, %v1223, %v1038
        %vm1241 = vcmask 523264
        %v1243 = vsel %vm1241, %v1226, %v1048
        %v1245 = vsel %vm1241, %v1228, %v1050
        %v1247 = vsel %vm1241, %v1230, %v1052
        %v1249 = vsel %vm1241, %v1232, %v1054
        %v1251 = vsel %vm1241, %v1234, %v1056
        %v1253 = vsel %vm1241, %v1236, %v1058
        %v1255 = vsel %vm1241, %v1238, %v1060
        %v1257 = vsel %vm1241, %v1240, %v1062
        %vm1258 = vcmask 654336
        %v1260 = vsel %vm1258, %v1243, %v1120
        %v1262 = vsel %vm1258, %v1245, %v1122
        %v1264 = vsel %vm1258, %v1247, %v1124
        %v1266 = vsel %vm1258, %v1249, %v1126
        %v1268 = vsel %vm1258, %v1251, %v1128
        %v1270 = vsel %vm1258, %v1253, %v1130
        %v1272 = vsel %vm1258, %v1255, %v1132
        %v1274 = vsel %vm1258, %v1257, %v1134
        %vm1275 = vcmask 785408
        %v1277 = vsel %vm1275, %v1260, %v1144
        %v1279 = vsel %vm1275, %v1262, %v1146
        %v1281 = vsel %vm1275, %v1264, %v1148
        %v1283 = vsel %vm1275, %v1266, %v1150
        %v1285 = vsel %vm1275, %v1268, %v1152
        %v1287 = vsel %vm1275, %v1270, %v1154
        %v1289 = vsel %vm1275, %v1272, %v1156
        %v1291 = vsel %vm1275, %v1274, %v1158
        %vm1292 = vcmask 916480
        %v1294 = vsel %vm1292, %v1277, %v1168
        %v1296 = vsel %vm1292, %v1279, %v1170
        %v1298 = vsel %vm1292, %v1281, %v1172
        %v1300 = vsel %vm1292, %v1283, %v1174
        %v1302 = vsel %vm1292, %v1285, %v1176
        %v1304 = vsel %vm1292, %v1287, %v1178
        %v1306 = vsel %vm1292, %v1289, %v1180
        %v1308 = vsel %vm1292, %v1291, %v1182
        %v1317 = vunpack.c.l.b16 %v1294
        %v1318 = vunpack.c.l.b16 %v956
        %v1319 = vunpack.c.l.b16 %v1296
        %v1320 = vunpack.c.l.b16 %v963
        %v1321 = vunpack.c.l.b16 %v1298
        %v1322 = vunpack.c.l.b16 %v970
        %v1323 = vunpack.c.l.b16 %v1300
        %v1324 = vunpack.c.l.b16 %v977
        %v1325 = vunpack.c.l.b16 %v1302
        %v1326 = vunpack.c.l.b16 %v984
        %v1327 = vunpack.c.l.b16 %v1304
        %v1328 = vunpack.c.l.b16 %v991
        %v1329 = vunpack.c.l.b16 %v1306
        %v1330 = vunpack.c.l.b16 %v998
        %v1331 = vunpack.c.l.b16 %v1308
        %v1332 = vunpack.c.l.b16 %v1189
        %v1333 = vld [vmem:[%s1] sm:$0xf]
        %v1334 = vld [vmem:[%s1 + $0x4] sm:$0xf]
        %v1335 = vld [vmem:[%s1 + $0x8] sm:$0xf]
        %v1336 = vld [vmem:[%s1 + $0xc] sm:$0xf]
        %v1337 = vld [vmem:[%s1 + $0x10] sm:$0xf]
        %v1338 = vld [vmem:[%s1 + $0x14] sm:$0xf]
        %v1339 = vld [vmem:[%s1 + $0x18] sm:$0xf]
        %v1340 = vld [vmem:[%s1 + $0x1c] sm:$0xf]
        %v1341 = vld [vmem:[%s1 + $0x20] sm:$0xf]
        %v1342 = vld [vmem:[%s1 + $0x24] sm:$0xf]
        %v1343 = vld [vmem:[%s1 + $0x28] sm:$0xf]
        %v1344 = vld [vmem:[%s1 + $0x2c] sm:$0xf]
        %v1345 = vld [vmem:[%s1 + $0x30] sm:$0xf]
        %v1346 = vld [vmem:[%s1 + $0x34] sm:$0xf]
        %v1347 = vld [vmem:[%s1 + $0x38] sm:$0xf]
        %v1348 = vld [vmem:[%s1 + $0x3c] sm:$0xf]
        %v1349 = vld [vmem:[%s1 + $0x40] sm:$0xf]
        %v1350 = vld [vmem:[%s1 + $0x44] sm:$0xf]
        %v1351 = vpack.c.b16 %v1319, %v1317
        %v1352 = vpack.c.b16 %v1320, %v1318
        %v1353 = vpack.c.b16 %v1323, %v1321
        %v1354 = vpack.c.b16 %v1324, %v1322
        %v1355 = vpack.c.b16 %v1327, %v1325
        %v1356 = vpack.c.b16 %v1328, %v1326
        %v1357 = vpack.c.b16 %v1331, %v1329
        %v1358 = vpack.c.b16 %v1332, %v1330
        %v1381 = vunpack.c.l.b16 %v1333
        %v1382 = vunpack.c.l.b16 %v1334
        %v1383 = vunpack.c.l.b16 %v1335
        %v1384 = vunpack.c.l.b16 %v1336
        %v1385 = vunpack.c.l.b16 %v1337
        %v1386 = vunpack.c.l.b16 %v1338
        %v1387 = vunpack.c.l.b16 %v1339
        %v1388 = vunpack.c.l.b16 %v1340
        %v1389 = vunpack.c.l.b16 %v1341
        %v1390 = vunpack.c.l.b16 %v1342
        %v1391 = vunpack.c.l.b16 %v1343
        %v1392 = vunpack.c.l.b16 %v1344
        %v1393 = vunpack.c.l.b16 %v1345
        %v1394 = vunpack.c.l.b16 %v1346
        %v1395 = vunpack.c.l.b16 %v1347
        %v1396 = vunpack.c.l.b16 %v1348
        %v1397 = vunpack.c.l.b16 %v1349
        %v1398 = vunpack.c.l.b16 %v1350
        %v1399 = vpack.c.b16 %v1382, %v1381
        %v1400 = vpack.c.b16 %v1384, %v1383
        %v1401 = vpack.c.b16 %v1386, %v1385
        %v1402 = vpack.c.b16 %v1388, %v1387
        %v1403 = vpack.c.b16 %v1390, %v1389
        %v1404 = vpack.c.b16 %v1392, %v1391
        %v1405 = vpack.c.b16 %v1394, %v1393
        %v1406 = vpack.c.b16 %v1396, %v1395
        %v1407 = vpack.c.b16 %v1398, %v1397
        %v1418 = vsel %vm1190, %v1352, 0
        %v1421 = vsel %vm1190, %v1354, 0
        %v1424 = vsel %vm1190, %v1356, 0
        %v1427 = vsel %vm1190, %v1358, 0
        %1429 = vmatprep.subr.bf16.mxu0 0
        %1430 = vmatpush1.bf16.msra.mxu0 %v1399
        %1431 = vmatprep.subr.bf16.mxu0 0
        %1432 = vmatpush1.bf16.msra.mxu0 %v1400
        %1433 = vmatprep.subr.bf16.mxu0 0
        %1434 = vmatpush1.bf16.msra.mxu0 %v1401
        %1435 = vmatprep.subr.bf16.mxu0 0
        %1436 = vmatpush1.bf16.msra.mxu0 %v1402
        %1437 = vmatprep.subr.bf16.mxu0 0
        %1438 = vmatpush1.bf16.msra.mxu0 %v1403
        %1439 = vmatprep.subr.bf16.mxu0 0
        %1440 = vmatpush1.bf16.msra.mxu0 %v1404
        %1441 = vmatprep.subr.bf16.mxu0 0
        %1442 = vmatpush1.bf16.msra.mxu0 %v1405
        %1443 = vmatprep.subr.bf16.mxu0 0
        %1444 = vmatpush1.bf16.msra.mxu0 %v1406
        %1445 = vmatprep.subr.bf16.mxu0 0
        %1446 = vmatpush1.bf16.msra.mxu0 %v1407
        %1447 = vmatprep.subr.bf16.mxu0 0
        %1448 = vmatpush1.bf16.msra.mxu0 0
        %1449 = vmatprep.subr.bf16.mxu0 0
        %1450 = vmatpush1.bf16.msra.mxu0 0
        %1451 = vmatprep.subr.bf16.mxu0 0
        %1452 = vmatpush1.bf16.msra.mxu0 0
        %1453 = vmatprep.subr.bf16.mxu0 0
        %1454 = vmatpush1.bf16.msra.mxu0 0
        %1455 = vmatprep.subr.bf16.mxu0 0
        %1456 = vmatpush1.bf16.msra.mxu0 0
        %1457 = vmatprep.subr.bf16.mxu0 0
        %1458 = vmatpush1.bf16.msra.mxu0 0
        %1459 = vmatprep.subr.bf16.mxu0 0
        %1460 = vmatpush1.bf16.msra.mxu0 0
        %1461 = vmatprep.mubr.bf16.mxu0 %v1418
        %1462 = vmatmul.mubr.bf16.gmra.mrb[0].mxu0 %v1351
        %v1463 = vpop.f32.mrb[0].mxu0
        %v1464 = vadd.f32 0.0, %v1463
        %v1465 = vpop.f32.mrb[0].mxu0
        %v1466 = vpop.f32.mrb[0].mxu0
        %v1467 = vadd.f32 0.0, %v1466
        %v1468 = vpop.f32.mrb[0].mxu0
        %1469 = vmatprep.mubr.bf16.mxu0 %v1421
        %1470 = vmatmul.mubr.bf16.gmra.mrb[0].mxu0 %v1353
        %v1471 = vpop.f32.mrb[0].mxu0
        %v1472 = vadd.f32 0.0, %v1471
        %v1473 = vpop.f32.mrb[0].mxu0
        %v1474 = vpop.f32.mrb[0].mxu0
        %v1475 = vadd.f32 0.0, %v1474
        %v1476 = vpop.f32.mrb[0].mxu0
        %1477 = vmatprep.mubr.bf16.mxu0 %v1424
        %1478 = vmatmul.mubr.bf16.gmra.mrb[0].mxu0 %v1355
        %v1479 = vpop.f32.mrb[0].mxu0
        %v1480 = vadd.f32 0.0, %v1479
        %v1481 = vpop.f32.mrb[0].mxu0
        %v1482 = vpop.f32.mrb[0].mxu0
        %v1483 = vadd.f32 0.0, %v1482
        %v1484 = vpop.f32.mrb[0].mxu0
        %1485 = vmatprep.mubr.bf16.mxu0 %v1427
        %1486 = vmatmul.mubr.bf16.gmra.mrb[0].mxu0 %v1357
        %v1487 = vpop.f32.mrb[0].mxu0
        %v1488 = vadd.f32 0.0, %v1487
        %v1489 = vpop.f32.mrb[0].mxu0
        %v1490 = vpop.f32.mrb[0].mxu0
        %v1491 = vadd.f32 0.0, %v1490
        %v1492 = vpop.f32.mrb[0].mxu0
        %1493 = vdwg.mxu0
        %1494 = vst [vmem:[%s150] sm:$0xff] %v1464
        %1495 = vst [vmem:[%s150 + $0x8] sm:$0xff] %v1467
        %1496 = vst [vmem:[%s150 + $0x10] sm:$0xff] %v1472
        %1497 = vst [vmem:[%s150 + $0x18] sm:$0xff] %v1475
        %1498 = vst [vmem:[%s150 + $0x20] sm:$0xff] %v1480
        %1499 = vst [vmem:[%s150 + $0x28] sm:$0xff] %v1483
        %1500 = vst [vmem:[%s150 + $0x30] sm:$0xff] %v1488
        %1501 = vst [vmem:[%s150 + $0x38] sm:$0xff] %v1491
        %s1502 = sand.u32 %s85, 1
        %s1503 = scalar_lea.sflag [#allocation3], %s1502
        %s1504 = sand.u32 %s85, 1
        %s1505 = smul.addr %s1504, 64
        %s1506 = scalar_lea.vmem [#allocation2], %s1505
        // Predicated region
        $region29: #{blurpool_conv2d_forward.1} parent=27 // pred_check
          %p1507 = pneg %p95
        $region30: #{blurpool_conv2d_forward.1} parent=27 // pred_check_branch
          %1509 = sbr.rel (%p1507) target = $region32
        $region31: #{blurpool_conv2d_forward.1} parent=27 // pred_region
          %s1510 = smul.u32 8, %s21
          %s1512 = ssub.s32 1024, 1024
          %1513 = vsyncadd %s1503, %s1512
          %s1514 = smul.addr %s20, 8
          %s1515 = sadd.s32 %s1510, %s1514
          %s1516 = smul.addr %s1515, 128
          %s1517 = scalar_lea.hbm %s2, %s1516
          %s1518 = sshll.u32 %s1506, 4
          %s1519 = int_to_ptr.vmem [resolvable:$true] %s1518
          %1524 = dma.vmem_to_hbm [thread:$0]  %s1519, 1024, %s1517, %s1503, 128, 128, 8
        $region32: #{blurpool_conv2d_forward.1} parent=27 // pred_fallthru
          _
      $region28: #{blurpool_conv2d_forward.1} parent=5 // pred_fallthru
        _
      %p1525 = scmp.le.s32.totalorder 2, %s11
      // Predicated region
      $region33: #{blurpool_conv2d_forward.1} parent=5 // pred_check
        %p1526 = pneg %p1525
      $region34: #{blurpool_conv2d_forward.1} parent=5 // pred_check_branch
        %1528 = sbr.rel (%p1526) target = $region36
      $region35: #{blurpool_conv2d_forward.1} parent=5 // pred_region
        %s1529 = ssub.s32 %s11, 2
        // Predicated region
        $region37: #{blurpool_conv2d_forward.1} parent=35 // pred_check
          %p1530 = pneg %p101
        $region38: #{blurpool_conv2d_forward.1} parent=35 // pred_check_branch
          %1532 = sbr.rel (%p1530) target = $region40
        $region39: #{blurpool_conv2d_forward.1} parent=35 // pred_region
          %s1533 = sand.u32 %s86, 1
          %s1534 = scalar_lea.sflag [#allocation3], %s1533
          %s1535 = sand.u32 %s86, 1
          %s1536 = smul.addr %s1535, 64
          %s1537 = scalar_lea.vmem [#allocation2], %s1536
          %1538 = dma.done %s1534, 1024
        $region40: #{blurpool_conv2d_forward.1} parent=35 // pred_fallthru
          _
      $region36: #{blurpool_conv2d_forward.1} parent=5 // pred_fallthru
        _
    $region6: #{blurpool_conv2d_forward.1} parent=1 // loop_footer
      %s15 = sadd.s32 1, %s11
    $region7: #{blurpool_conv2d_forward.1} parent=1 // loop_footer_branch
      %10 = sbr.rel target = $region3
    $region8: #{blurpool_conv2d_forward.1} parent=1 // loop_exit
      _
    %1539 = vsyncpa [#allocation3], 1
    %s1540 = scalar_lea.sflag [#allocation3], 1
    %1541 = vsyncpa %s1540, 1

</llo_original>
